<compile_context>
chip_gen: v7x
topology: tpu7x:2x2x1
jax: 0.10.0
libtpu: 0.0.40
codegen_flags: <defaults>
</compile_context>

<pallas_src>
import functools

import numpy as np
import jax
import jax.numpy as jnp
from jax import lax
from jax.experimental import pallas as pl
from jax.experimental.pallas import tpu as pltpu


def _cb_focal_kernel(logits_ref, targets_ref, wsamp_ref, out_ref, *,
                     gamma, block_b, total_b, steps_per_core):
    c = pl.program_id(0)          # core / batch-half index ("parallel")
    s = pl.program_id(1)          # batch-tile index within this half ("arbitrary")

    @pl.when(s == 0)
    def _init():
        out_ref[...] = jnp.zeros_like(out_ref)

    x = logits_ref[...].astype(jnp.float32)              # [TB, C] (native dtype -> f32)
    tgt = targets_ref[...]                               # [TB, 1] int32
    w = wsamp_ref[...].astype(jnp.float32)               # [TB, 1] per-sample CB weight
    TB, C = x.shape

    # Logical (unclamped) rows of this tile; padded / out-of-range rows get
    # masked to zero so they contribute nothing to the sum.
    blk = c * steps_per_core + s
    rows = blk * block_b + lax.broadcasted_iota(jnp.int32, (TB, 1), 0)
    valid = rows < total_b                               # [TB, 1] bool

    # Target "gather" via lane-iota compare (no f32 one-hot materialized).
    col = lax.broadcasted_iota(jnp.int32, (TB, C), 1)
    is_tgt = col == tgt                                  # [TB, C] bool

    # Numerically-stable log-softmax at the target only (log_probs is never
    # materialized -- one fewer [TB,C] f32 temporary + full-tile subtract).
    m = jnp.max(x, axis=1, keepdims=True)                # [TB, 1]
    shifted = x - m
    shifted_t = jnp.sum(jnp.where(is_tgt, shifted, 0.0), axis=1, keepdims=True)
    lse = jnp.log(jnp.sum(jnp.exp(shifted), axis=1, keepdims=True))
    log_pt = shifted_t - lse                             # [TB, 1]

    # Clamp guards the general-gamma jnp.power against pt marginally > 1.
    one_minus_pt = jnp.maximum(1.0 - jnp.exp(log_pt), 0.0)
    if gamma == 2.0:        # integer-gamma specialization: one VPU mul, no EUP
        focal_w = one_minus_pt * one_minus_pt
    elif gamma == 1.0:
        focal_w = one_minus_pt
    elif gamma == 0.0:
        focal_w = jnp.ones_like(one_minus_pt)
    else:
        focal_w = jnp.power(one_minus_pt, jnp.float32(gamma))

    loss = jnp.where(valid, -w * focal_w * log_pt, 0.0)  # [TB, 1]

    # Per-core partial sum; output block is resident across the "arbitrary"
    # axis (constant block index), so HBM writeback happens once per core.
    out_ref[...] += jnp.sum(loss)


def _tpu_generation_config():
    """Best-effort per-generation tuning knobs (safe defaults on failure)."""
    cfg = dict(vmem_limit=32 << 20, target_tile=4 << 20, num_splits=1)
    kind = ""
    try:
        kind = jax.devices()[0].device_kind.lower()
    except Exception:
        pass
    k = kind.replace(" ", "")
    if ("v7" in k) or ("tpu7" in k) or ("7x" in k):
        # v7x: 64 MiB VMEM/TC, 2 TCs, 3.2 TB/s HBM -> ~7 MiB tiles, 48 MiB limit.
        cfg = dict(vmem_limit=48 << 20, target_tile=7 << 20, num_splits=2)
    elif "v6" in k:
        # v6e: 128 MiB VMEM, 1 TC -> bigger tiles, fewer grid steps.
        cfg = dict(vmem_limit=64 << 20, target_tile=12 << 20, num_splits=1)
    elif ("v5p" in k) or ("v4" in k):
        # Megacore chips: 2 TCs share the chip.
        cfg = dict(vmem_limit=64 << 20, target_tile=8 << 20, num_splits=2)
    elif "v5" in k:
        # v5e / v5 lite: slower HBM, 2-4 MiB tiles already hide step overhead.
        cfg = dict(vmem_limit=32 << 20, target_tile=3 << 20, num_splits=1)
    # Refine the limit from the actual device if the query is available.
    try:
        cap = int(pltpu.get_tpu_info().vmem_capacity_bytes)
        cfg["vmem_limit"] = min(cfg["vmem_limit"], max(16 << 20, int(0.75 * cap)))
    except Exception:
        pass
    return cfg


def class_balanced_focal_loss(logits, targets, weights, *, gamma=2.0,
                              block_b=None, num_splits=None, reduction="mean"):
    """logits: [B, C] (any float dtype), targets: [B] int, weights: [C] float -> scalar."""
    B, C = logits.shape
    # Keep logits in their native dtype (no wrapper-side f32 upcast): the
    # kernel is HBM-bandwidth-bound, so streaming bf16 halves the bytes moved.
    targets = targets.astype(jnp.int32)
    targets2d = targets.reshape(B, 1)
    # Wrapper-side O(B) gather of the class-balanced weight per sample.
    wsamp2d = weights.astype(jnp.float32)[targets].reshape(B, 1)

    cfg = _tpu_generation_config()
    NC = max(1, int(num_splits if num_splits is not None else cfg["num_splits"]))

    itemsize = jnp.dtype(logits.dtype).itemsize
    mult = 8 * max(1, 4 // itemsize)       # sublane pack: 8 f32 / 16 bf16 / 32 int8

    if block_b is None:
        row_logits = max(1, C * itemsize)
        # VMEM per row: double-buffered logits + two lane-padded [TB,1] aux
        # blocks (x2 buffers, 128-lane padded = 512 B each) + ~4 live [TB,C]
        # f32 temporaries inside the body.
        row_vmem = 2 * row_logits + 4 * 512 + 4 * C * 4
        by_tile = cfg["target_tile"] // row_logits
        by_vmem = max(mult, (int(0.75 * cfg["vmem_limit"]) - (2 << 20)) // row_vmem)
        block_b = max(mult, min(by_tile, by_vmem))
    if B <= block_b or B < mult:
        block_b = B
    else:
        block_b = max(mult, (block_b // mult) * mult)

    nb = pl.cdiv(B, block_b)        # row-blocks that exist in the input
    spc = pl.cdiv(nb, NC)           # row-blocks handled per core split
    last_blk = nb - 1

    def row_block(c, s):
        # Clamp so out-of-range steps re-read the last valid block; their
        # logical rows are >= B and are masked to zero inside the kernel.
        return jnp.minimum(c * spc + s, last_blk)

    kern = functools.partial(_cb_focal_kernel, gamma=float(gamma),
                             block_b=block_b, total_b=B, steps_per_core=spc)

    partial = pl.pallas_call(
        kern,
        out_shape=jax.ShapeDtypeStruct((NC, 8, 128), jnp.float32),
        grid=(NC, spc),
        in_specs=[
            pl.BlockSpec((block_b, C), lambda c, s: (row_block(c, s), 0)),
            pl.BlockSpec((block_b, 1), lambda c, s: (row_block(c, s), 0)),
            pl.BlockSpec((block_b, 1), lambda c, s: (row_block(c, s), 0)),
        ],
        out_specs=pl.BlockSpec((1, 8, 128), lambda c, s: (c, 0, 0)),
        compiler_params=pltpu.CompilerParams(
            dimension_semantics=("parallel", "arbitrary"),
            vmem_limit_bytes=int(cfg["vmem_limit"]),
        ),
        cost_estimate=pl.CostEstimate(
            flops=int(6 * B * C),
            transcendentals=int(B * C + 3 * B),
            bytes_accessed=int(itemsize * B * C + 8 * B + NC * 8 * 128 * 4),
        ),
    )(logits, targets2d, wsamp2d)

    # Every lane of each per-core tile holds the same partial sum; pick [0,0].
    total = jnp.sum(partial[:, 0, 0])
    if reduction == "mean":
        return total / jnp.float32(B)
    if reduction == "sum":
        return total
    # TODO(synk): reduction='none' (per-sample [B] output) not implemented as a kernel output.
    raise NotImplementedError("reduction must be 'mean' or 'sum'")


def make_cb_weights(samples_per_cls, beta=0.999):
    """Deterministic class-balanced weights, identical math to the PyTorch __init__."""
    samples_per_cls = np.asarray(samples_per_cls, dtype=np.float64)
    eff_num = 1.0 - np.power(beta, samples_per_cls)
    weights = (1.0 - beta) / eff_num
    weights = weights / weights.sum() * len(samples_per_cls)
    return jnp.asarray(weights, dtype=jnp.float32)


def _reference(logits, targets, weights, gamma=2.0):
    """Pure-JAX reference mirroring the PyTorch forward (reduction='mean')."""
    logits = logits.astype(jnp.float32)
    probs = jax.nn.softmax(logits, axis=1)
    pt = probs[jnp.arange(logits.shape[0]), targets]
    focal_w = (1.0 - pt) ** gamma
    cls_w = weights[targets]
    loss = -cls_w * focal_w * jnp.log(pt)
    return loss.mean()


if __name__ == "__main__":
    # Small deterministic example.  B=40 with block_b=16 and num_splits=2
    # exercises the full path: multi-step pipeline, both "parallel" grid
    # slices, a ragged last block (rows 40..47 masked) and a clamped
    # out-of-range step on core split 1.
    B, C = 40, 16
    key = jax.random.PRNGKey(0)
    k_logits, k_tgt = jax.random.split(key)

    logits = jax.random.normal(k_logits, (B, C), dtype=jnp.float32) * 2.0
    targets = jax.random.randint(k_tgt, (B,), 0, C, dtype=jnp.int32)

    samples_per_cls = [int(10 + 37 * (i + 1)) for i in range(C)]
    weights = make_cb_weights(samples_per_cls, beta=0.999)

    # f32 path (tight check vs. pure-JAX reference).
    loss = class_balanced_focal_loss(logits, targets, weights, gamma=2.0,
                                     block_b=16, num_splits=2)
    loss = jax.block_until_ready(loss)
    ref = _reference(logits, targets, weights, gamma=2.0)
    np.testing.assert_allclose(np.asarray(loss), np.asarray(ref),
                               rtol=1e-5, atol=1e-6)

    # bf16 streaming path (native-dtype pass-through, cast in-kernel).
    logits_bf16 = logits.astype(jnp.bfloat16)
    loss_bf16 = class_balanced_focal_loss(logits_bf16, targets, weights,
                                          gamma=2.0, block_b=16, num_splits=2)
    loss_bf16 = jax.block_until_ready(loss_bf16)
    ref_bf16 = _reference(logits_bf16.astype(jnp.float32), targets, weights, gamma=2.0)
    np.testing.assert_allclose(np.asarray(loss_bf16), np.asarray(ref_bf16),
                               rtol=5e-3, atol=1e-4)

    print("KERNEL_OK")
</pallas_src>

<mosaic_0001>
module attributes {stable_mosaic.version = 11 : i64} {
  func.func @_cb_focal_kernel(%arg0: i32, %arg1: i32, %arg2: memref<16x16xf32, #tpu.memory_space<vmem>>, %arg3: memref<16x1xi32, #tpu.memory_space<vmem>>, %arg4: memref<16x1xf32, #tpu.memory_space<vmem>>, %arg5: memref<1x8x128xf32, #tpu.memory_space<vmem>>) attributes {dimension_semantics = [#tpu.dimension_semantics<parallel>, #tpu.dimension_semantics<arbitrary>], iteration_bounds = array<i64: 2, 2>, scalar_prefetch = 0 : i64, scratch_operands = 0 : i64, tpu.core_type = #tpu.core_type<tc>, window_params = [{transform_indices = @transform_0, window_bounds = array<i64: 16, 16>}, {transform_indices = @transform_1, window_bounds = array<i64: 16, 1>}, {transform_indices = @transform_2, window_bounds = array<i64: 16, 1>}, {transform_indices = @transform_3, window_bounds = array<i64: 1, 8, 128>}]} {
    %c0_i32 = arith.constant 0 : i32
    %0 = arith.cmpi eq, %arg1, %c0_i32 : i32
    %1 = arith.extui %0 : i1 to i32
    %c0_i32_0 = arith.constant 0 : i32
    %2 = arith.cmpi ne, %1, %c0_i32_0 : i32
    scf.if %2 {
      %cst_20 = arith.constant 0.000000e+00 : f32
      %50 = vector.broadcast %cst_20 : f32 to vector<1x8x128xf32>
      %c0_21 = arith.constant 0 : index
      %c0_22 = arith.constant 0 : index
      %c0_23 = arith.constant 0 : index
      %51 = vector.load %arg5[%c0_21, %c0_22, %c0_23] : memref<1x8x128xf32, #tpu.memory_space<vmem>>, vector<1x8x128xf32>
      tpu.vector_store %arg5[%c0_21, %c0_22, %c0_23], %50 {strides = array<i32>} : memref<1x8x128xf32, #tpu.memory_space<vmem>>, vector<1x8x128xf32>,
    } else {
    }
    %c0 = arith.constant 0 : index
    %c0_1 = arith.constant 0 : index
    %3 = vector.load %arg2[%c0, %c0_1] : memref<16x16xf32, #tpu.memory_space<vmem>>, vector<16x16xf32>
    %c0_2 = arith.constant 0 : index
    %c0_3 = arith.constant 0 : index
    %4 = vector.load %arg3[%c0_2, %c0_3] : memref<16x1xi32, #tpu.memory_space<vmem>>, vector<16x1xi32>
    %c0_4 = arith.constant 0 : index
    %c0_5 = arith.constant 0 : index
    %5 = vector.load %arg4[%c0_4, %c0_5] : memref<16x1xf32, #tpu.memory_space<vmem>>, vector<16x1xf32>
    %c2_i32 = arith.constant 2 : i32
    %6 = arith.muli %arg0, %c2_i32 : i32
    %7 = arith.addi %6, %arg1 : i32
    %c16_i32 = arith.constant 16 : i32
    %8 = arith.muli %7, %c16_i32 : i32
    %9 = tpu.iota {dimensions = array<i32: 0>} : vector<16x1xi32>
    %10 = vector.broadcast %8 : i32 to vector<16x1xi32>
    %11 = arith.addi %10, %9 : vector<16x1xi32>
    %c40_i32 = arith.constant 40 : i32
    %12 = vector.broadcast %c40_i32 : i32 to vector<16x1xi32>
    %13 = arith.cmpi slt, %11, %12 : vector<16x1xi32>
    %14 = tpu.iota {dimensions = array<i32: 1>} : vector<16x16xi32>
    %15 = vector.broadcast %4 : vector<16x1xi32> to vector<16x16xi32>
    %16 = arith.cmpi eq, %14, %15 : vector<16x16xi32>
    %cst = arith.constant dense<0xFF800000> : vector<16xf32>
    %17 = vector.multi_reduction <maximumf>, %3, %cst [1] : vector<16x16xf32> to vector<16xf32>
    %18 = vector.shape_cast %17 : vector<16xf32> to vector<16x1xf32>
    %19 = vector.broadcast %18 : vector<16x1xf32> to vector<16x16xf32>
    %20 = arith.subf %3, %19 : vector<16x16xf32>
    %cst_6 = arith.constant 0.000000e+00 : f32
    %21 = vector.broadcast %cst_6 : f32 to vector<16x16xf32>
    %22 = arith.select %16, %20, %21 : vector<16x16xi1>, vector<16x16xf32>
    %cst_7 = arith.constant dense<0.000000e+00> : vector<16xf32>
    %23 = vector.multi_reduction <add>, %22, %cst_7 [1] : vector<16x16xf32> to vector<16xf32>
    %24 = vector.shape_cast %23 : vector<16xf32> to vector<16x1xf32>
    %25 = math.exp %20 : vector<16x16xf32>
    %cst_8 = arith.constant dense<0.000000e+00> : vector<16xf32>
    %26 = vector.multi_reduction <add>, %25, %cst_8 [1] : vector<16x16xf32> to vector<16xf32>
    %27 = vector.shape_cast %26 : vector<16xf32> to vector<16x1xf32>
    %28 = math.log %27 : vector<16x1xf32>
    %29 = arith.subf %24, %28 : vector<16x1xf32>
    %30 = math.exp %29 : vector<16x1xf32>
    %cst_9 = arith.constant 1.000000e+00 : f32
    %31 = vector.broadcast %cst_9 : f32 to vector<16x1xf32>
    %32 = arith.subf %31, %30 : vector<16x1xf32>
    %cst_10 = arith.constant 0.000000e+00 : f32
    %33 = vector.broadcast %cst_10 : f32 to vector<16x1xf32>
    %34 = arith.maximumf %32, %33 : vector<16x1xf32>
    %35 = arith.mulf %34, %34 : vector<16x1xf32>
    %cst_11 = arith.constant 0.000000e+00 : f32
    %36 = vector.broadcast %cst_11 : f32 to vector<16x1xf32>
    %37 = arith.subf %36, %5 : vector<16x1xf32>
    %38 = arith.mulf %37, %35 : vector<16x1xf32>
    %39 = arith.mulf %38, %29 : vector<16x1xf32>
    %cst_12 = arith.constant 0.000000e+00 : f32
    %40 = vector.broadcast %cst_12 : f32 to vector<16x1xf32>
    %41 = arith.select %13, %39, %40 : vector<16x1xi1>, vector<16x1xf32>
    %c0_13 = arith.constant 0 : index
    %c0_14 = arith.constant 0 : index
    %c0_15 = arith.constant 0 : index
    %42 = vector.load %arg5[%c0_13, %c0_14, %c0_15] : memref<1x8x128xf32, #tpu.memory_space<vmem>>, vector<1x8x128xf32>
    %43 = vector.shape_cast %41 : vector<16x1xf32> to vector<1x16x1xf32>
    %cst_16 = arith.constant dense<0.000000e+00> : vector<1xf32>
    %44 = vector.multi_reduction <add>, %43, %cst_16 [1, 2] : vector<1x16x1xf32> to vector<1xf32>
    %45 = vector.shape_cast %44 : vector<1xf32> to vector<1x1x1xf32>
    %46 = vector.extract %45[0, 0, 0] : f32 from vector<1x1x1xf32>
    %47 = vector.broadcast %46 : f32 to vector<1x8x128xf32>
    %48 = arith.addf %42, %47 : vector<1x8x128xf32>
    %c0_17 = arith.constant 0 : index
    %c0_18 = arith.constant 0 : index
    %c0_19 = arith.constant 0 : index
    %49 = vector.load %arg5[%c0_17, %c0_18, %c0_19] : memref<1x8x128xf32, #tpu.memory_space<vmem>>, vector<1x8x128xf32>
    tpu.vector_store %arg5[%c0_17, %c0_18, %c0_19], %48 {strides = array<i32>} : memref<1x8x128xf32, #tpu.memory_space<vmem>>, vector<1x8x128xf32>,
    return
  }
  func.func @transform_0(%arg0: i32, %arg1: i32) -> (i32, i32) {
    %c2_i32 = arith.constant 2 : i32
    %0 = arith.muli %arg0, %c2_i32 : i32
    %1 = arith.addi %0, %arg1 : i32
    %c2_i32_0 = arith.constant 2 : i32
    %2 = arith.minsi %1, %c2_i32_0 : i32
    %c0_i32 = arith.constant 0 : i32
    %c0_i32_1 = arith.constant 0 : i32
    return %2, %c0_i32 : i32, i32
  }
  func.func @transform_1(%arg0: i32, %arg1: i32) -> (i32, i32) {
    %c2_i32 = arith.constant 2 : i32
    %0 = arith.muli %arg0, %c2_i32 : i32
    %1 = arith.addi %0, %arg1 : i32
    %c2_i32_0 = arith.constant 2 : i32
    %2 = arith.minsi %1, %c2_i32_0 : i32
    %c0_i32 = arith.constant 0 : i32
    %c0_i32_1 = arith.constant 0 : i32
    return %2, %c0_i32 : i32, i32
  }
  func.func @transform_2(%arg0: i32, %arg1: i32) -> (i32, i32) {
    %c2_i32 = arith.constant 2 : i32
    %0 = arith.muli %arg0, %c2_i32 : i32
    %1 = arith.addi %0, %arg1 : i32
    %c2_i32_0 = arith.constant 2 : i32
    %2 = arith.minsi %1, %c2_i32_0 : i32
    %c0_i32 = arith.constant 0 : i32
    %c0_i32_1 = arith.constant 0 : i32
    return %2, %c0_i32 : i32, i32
  }
  func.func @transform_3(%arg0: i32, %arg1: i32) -> (i32, i32, i32) {
    %c0_i32 = arith.constant 0 : i32
    %c0_i32_0 = arith.constant 0 : i32
    %c0_i32_1 = arith.constant 0 : i32
    return %arg0, %c0_i32, %c0_i32_0 : i32, i32, i32
  }
}

</mosaic_0001>

<llo_original>
// kernel: tpu_custom_call.1
$region0: #{tpu_custom_call.1}
  #allocation0 [shape = 'u32[]', space=smem, size = 0x4, offset = 0x4, fixed_abs, tag = 'smem constant byte address 0x4 - core index']
  #allocation1 [shape = 'u32[144,128]{1,0:T(1,128)}', space=vmem, size = 0x12000, scoped, tag = 'internal scratch']
  %s0 = inlined_call_operand.vmem [shape: f32[40,16], index: 0, kind: input, shape index: {}]
  %s1 = inlined_call_operand.vmem [shape: s32[40,1], index: 1, kind: input, shape index: {}]
  %s2 = inlined_call_operand.vmem [shape: f32[40,1], index: 2, kind: input, shape index: {}]
  %s3 = inlined_call_operand.hbm [shape: f32[2,8,128], index: 3, kind: output, shape index: {}]
  %s4 = sld [smem:[#allocation0]]
  $region49: #{tpu_custom_call.1} parent=0
    _
  %s6 = ssub.s32 1, %s4
  %s7 = scalar_select 0, %s6, %s4
  $region1: #{tpu_custom_call.1} parent=0
    #allocation2 [shape = 'u8[8192]{0}', space=vmem, size = 0x2000, scoped, tag = 'output window, operand 0']
    #allocation3 [shape = 's32[2]{0}', space=sflag, size = 0x8, scoped, tag = 'scoped memory for tpu_custom_call.1']
    %8 = vsyncpa [#allocation3], 0
    %s9 = scalar_lea.sflag [#allocation3], 1
    %10 = vsyncpa %s9, 0
    loop: start=0, step=1, limit=6
    $region2: #{tpu_custom_call.1} parent=1 // loop_pre_header
      _
    $region3: #{tpu_custom_call.1} parent=1 // loop_header
      %s12 = sphi 0, %s16
      %p13 = scmp.ge.s32.totalorder %s12, 6
      %s19 = sphi 0, %s31
      %s20 = sphi 0, %s27
      %s21 = sphi 0, %s19
      %s22 = sphi 0, %s20
      %s23 = sphi 0, %s21
      %s24 = sphi 0, %s22
      %s42 = sphi 0, %s44
      %s45 = sphi 0, %s42
      %s46 = sphi 0, %s45
      %s62 = sphi 0, %s46
      %s76 = sphi 0, %s78
      %s79 = sphi 0, %s76
      %s80 = sphi 0, %s79
      %s96 = sphi 0, %s80
      %s110 = sphi 0, %s112
      %s113 = sphi 0, %s110
      %s114 = sphi 0, %s113
      %s130 = sphi 0, %s114
      %s136 = sphi 0, %s138
      %s139 = sphi 0, %s136
      %s140 = sphi 0, %s139
      %s156 = sphi 0, %s140
    $region4: #{tpu_custom_call.1} parent=1 // loop_header_branch
      %15 = sbr.rel (%p13) target = $region8
    $region5: #{tpu_custom_call.1} parent=1 // loop_body
      %s17 = ssub.s32 %s12, 1
      %s18 = ssub.s32 %s12, 2
      %s25 = sadd.s32 1, %s20
      %p26 = scmp.ge.s32.totalorder %s25, 2
      %s27 = scalar_select %p26, 0, %s25
      %s28 = sadd.s32 1, %s19
      %s29 = scalar_select %p26, %s28, %s19
      %p30 = scmp.ge.s32.totalorder %s29, 2
      %s31 = scalar_select %p30, 0, %s29
      %s32 = smul.u32 %s19, 2
      %s33 = sadd.s32 %s32, %s20
      %p34 = scmp.lt.s32.totalorder %s33, 2
      %s35 = scalar_select %p34, %s33, 2
      %s36 = smul.u32 %s31, 2
      %s37 = sadd.s32 %s36, %s27
      %p38 = scmp.lt.s32.totalorder %s37, 2
      %s39 = scalar_select %p38, %s37, 2
      %s40 = ssub.s32 %s35, %s39
      %p41 = scmp.eq.s32.totalorder %s40, 0
      %s43 = sadd.s32 %s42, 1
      %s44 = scalar_select %p41, %s42, %s43
      %p47 = pneg %p41
      %p48 = scmp.eq.s32.totalorder %s12, 3
      %p49 = por %p47, %p48
      %p50 = scmp.ne.s32.totalorder %s42, %s45
      %p51 = scmp.eq.s32.totalorder %s12, 0
      %p52 = por %p50, %p51
      %p53 = scmp.ne.s32.totalorder %s42, %s45
      %p54 = scmp.eq.s32.totalorder %s17, 3
      %p55 = por %p53, %p54
      %p56 = scmp.ne.s32.totalorder %s45, %s46
      %p57 = scmp.eq.s32.totalorder %s17, 0
      %p58 = por %p56, %p57
      %p59 = scmp.ne.s32.totalorder %s45, %s46
      %p60 = scmp.eq.s32.totalorder %s18, 3
      %p61 = por %p59, %p60
      %p63 = scmp.ne.s32.totalorder %s46, %s62
      %p64 = scmp.eq.s32.totalorder %s18, 0
      %p65 = por %p63, %p64
      %s66 = smul.u32 %s19, 2
      %s67 = sadd.s32 %s66, %s20
      %p68 = scmp.lt.s32.totalorder %s67, 2
      %s69 = scalar_select %p68, %s67, 2
      %s70 = smul.u32 %s31, 2
      %s71 = sadd.s32 %s70, %s27
      %p72 = scmp.lt.s32.totalorder %s71, 2
      %s73 = scalar_select %p72, %s71, 2
      %s74 = ssub.s32 %s69, %s73
      %p75 = scmp.eq.s32.totalorder %s74, 0
      %s77 = sadd.s32 %s76, 1
      %s78 = scalar_select %p75, %s76, %s77
      %p81 = pneg %p75
      %p82 = scmp.eq.s32.totalorder %s12, 3
      %p83 = por %p81, %p82
      %p84 = scmp.ne.s32.totalorder %s76, %s79
      %p85 = scmp.eq.s32.totalorder %s12, 0
      %p86 = por %p84, %p85
      %p87 = scmp.ne.s32.totalorder %s76, %s79
      %p88 = scmp.eq.s32.totalorder %s17, 3
      %p89 = por %p87, %p88
      %p90 = scmp.ne.s32.totalorder %s79, %s80
      %p91 = scmp.eq.s32.totalorder %s17, 0
      %p92 = por %p90, %p91
      %p93 = scmp.ne.s32.totalorder %s79, %s80
      %p94 = scmp.eq.s32.totalorder %s18, 3
      %p95 = por %p93, %p94
      %p97 = scmp.ne.s32.totalorder %s80, %s96
      %p98 = scmp.eq.s32.totalorder %s18, 0
      %p99 = por %p97, %p98
      %s100 = smul.u32 %s19, 2
      %s101 = sadd.s32 %s100, %s20
      %p102 = scmp.lt.s32.totalorder %s101, 2
      %s103 = scalar_select %p102, %s101, 2
      %s104 = smul.u32 %s31, 2
      %s105 = sadd.s32 %s104, %s27
      %p106 = scmp.lt.s32.totalorder %s105, 2
      %s107 = scalar_select %p106, %s105, 2
      %s108 = ssub.s32 %s103, %s107
      %p109 = scmp.eq.s32.totalorder %s108, 0
      %s111 = sadd.s32 %s110, 1
      %s112 = scalar_select %p109, %s110, %s111
      %p115 = pneg %p109
      %p116 = scmp.eq.s32.totalorder %s12, 3
      %p117 = por %p115, %p116
      %p118 = scmp.ne.s32.totalorder %s110, %s113
      %p119 = scmp.eq.s32.totalorder %s12, 0
      %p120 = por %p118, %p119
      %p121 = scmp.ne.s32.totalorder %s110, %s113
      %p122 = scmp.eq.s32.totalorder %s17, 3
      %p123 = por %p121, %p122
      %p124 = scmp.ne.s32.totalorder %s113, %s114
      %p125 = scmp.eq.s32.totalorder %s17, 0
      %p126 = por %p124, %p125
      %p127 = scmp.ne.s32.totalorder %s113, %s114
      %p128 = scmp.eq.s32.totalorder %s18, 3
      %p129 = por %p127, %p128
      %p131 = scmp.ne.s32.totalorder %s114, %s130
      %p132 = scmp.eq.s32.totalorder %s18, 0
      %p133 = por %p131, %p132
      %s134 = ssub.s32 %s19, %s31
      %p135 = scmp.eq.s32.totalorder %s134, 0
      %s137 = sadd.s32 %s136, 1
      %s138 = scalar_select %p135, %s136, %s137
      %p141 = pneg %p135
      %p142 = scmp.eq.s32.totalorder %s12, 3
      %p143 = por %p141, %p142
      %p144 = scmp.ne.s32.totalorder %s136, %s139
      %p145 = scmp.eq.s32.totalorder %s12, 0
      %p146 = por %p144, %p145
      %p147 = scmp.ne.s32.totalorder %s136, %s139
      %p148 = scmp.eq.s32.totalorder %s17, 3
      %p149 = por %p147, %p148
      %p150 = scmp.ne.s32.totalorder %s139, %s140
      %p151 = scmp.eq.s32.totalorder %s17, 0
      %p152 = por %p150, %p151
      %p153 = scmp.ne.s32.totalorder %s139, %s140
      %p154 = scmp.eq.s32.totalorder %s18, 3
      %p155 = por %p153, %p154
      %p157 = scmp.ne.s32.totalorder %s140, %s156
      %p158 = scmp.eq.s32.totalorder %s18, 0
      %p159 = por %p157, %p158
      %p160 = scmp.le.s32.totalorder 1, %s12
      %p161 = scmp.lt.s32.totalorder %s12, 5
      %p162 = pnand %p160, %p161
      %p163 = pneg %p162
      // Predicated region
      $region9: #{tpu_custom_call.1} parent=5 // pred_check
        _
      $region10: #{tpu_custom_call.1} parent=5 // pred_check_branch
        %165 = sbr.rel (%p162) target = $region12
      $region11: #{tpu_custom_call.1} parent=5 // pred_region
        %s166 = ssub.s32 %s12, 1
      $region12: #{tpu_custom_call.1} parent=5 // pred_fallthru
        _
      %p167 = scmp.lt.s32.totalorder %s12, 4
      // Predicated region
      $region13: #{tpu_custom_call.1} parent=5 // pred_check
        %p168 = pneg %p167
      $region14: #{tpu_custom_call.1} parent=5 // pred_check_branch
        %170 = sbr.rel (%p168) target = $region16
      $region15: #{tpu_custom_call.1} parent=5 // pred_region
        // Predicated region
        $region17: #{tpu_custom_call.1} parent=15 // pred_check
          %p171 = pneg %p52
        $region18: #{tpu_custom_call.1} parent=15 // pred_check_branch
          %173 = sbr.rel (%p171) target = $region20
        $region19: #{tpu_custom_call.1} parent=15 // pred_region
          %s174 = smul.u32 %s19, 2
          %s175 = sadd.s32 %s174, %s20
          %p176 = scmp.lt.s32.totalorder %s175, 2
          %s177 = scalar_select %p176, %s175, 2
          %s178 = smul.u32 2, %s177
          %s179 = ssub.s32 5, %s178
          %p180 = scmp.lt.s32.totalorder %s179, 2
          %s181 = scalar_select %p180, %s179, 2
          %s182 = smul.u32 128, %s181
          %p183 = scmp.lt.s32.totalorder %s178, 4
          %s184 = scalar_select %p183, %s178, 4
          %s185 = smul.addr %s184, 8
          %s186 = scalar_lea.vmem %s0, %s185
          %s187 = smul.u32 %s19, 2
          %s188 = sadd.s32 %s187, %s20
          %p189 = scmp.lt.s32.totalorder %s188, 2
          %s190 = scalar_select %p189, %s188, 2
          %s191 = smul.u32 2, %s190
          %s192 = ssub.s32 5, %s191
          %p193 = scmp.lt.s32.totalorder %s192, 2
          %s194 = scalar_select %p193, %s192, 2
          %s195 = smul.u32 128, %s194
        $region20: #{tpu_custom_call.1} parent=15 // pred_fallthru
          _
        // Predicated region
        $region21: #{tpu_custom_call.1} parent=15 // pred_check
          %p196 = pneg %p86
        $region22: #{tpu_custom_call.1} parent=15 // pred_check_branch
          %198 = sbr.rel (%p196) target = $region24
        $region23: #{tpu_custom_call.1} parent=15 // pred_region
          %s199 = smul.u32 %s19, 2
          %s200 = sadd.s32 %s199, %s20
          %p201 = scmp.lt.s32.totalorder %s200, 2
          %s202 = scalar_select %p201, %s200, 2
          %s203 = smul.u32 2, %s202
          %s204 = ssub.s32 5, %s203
          %p205 = scmp.lt.s32.totalorder %s204, 2
          %s206 = scalar_select %p205, %s204, 2
          %s207 = smul.u32 128, %s206
          %p208 = scmp.lt.s32.totalorder %s203, 4
          %s209 = scalar_select %p208, %s203, 4
          %s210 = smul.addr %s209, 8
          %s211 = scalar_lea.vmem %s1, %s210
          %s212 = smul.u32 %s19, 2
          %s213 = sadd.s32 %s212, %s20
          %p214 = scmp.lt.s32.totalorder %s213, 2
          %s215 = scalar_select %p214, %s213, 2
          %s216 = smul.u32 2, %s215
          %s217 = ssub.s32 5, %s216
          %p218 = scmp.lt.s32.totalorder %s217, 2
          %s219 = scalar_select %p218, %s217, 2
          %s220 = smul.u32 128, %s219
        $region24: #{tpu_custom_call.1} parent=15 // pred_fallthru
          _
        // Predicated region
        $region25: #{tpu_custom_call.1} parent=15 // pred_check
          %p221 = pneg %p120
        $region26: #{tpu_custom_call.1} parent=15 // pred_check_branch
          %223 = sbr.rel (%p221) target = $region28
        $region27: #{tpu_custom_call.1} parent=15 // pred_region
          %s224 = smul.u32 %s19, 2
          %s225 = sadd.s32 %s224, %s20
          %p226 = scmp.lt.s32.totalorder %s225, 2
          %s227 = scalar_select %p226, %s225, 2
          %s228 = smul.u32 2, %s227
          %s229 = ssub.s32 5, %s228
          %p230 = scmp.lt.s32.totalorder %s229, 2
          %s231 = scalar_select %p230, %s229, 2
          %s232 = smul.u32 128, %s231
          %p233 = scmp.lt.s32.totalorder %s228, 4
          %s234 = scalar_select %p233, %s228, 4
          %s235 = smul.addr %s234, 8
          %s236 = scalar_lea.vmem %s2, %s235
          %s237 = smul.u32 %s19, 2
          %s238 = sadd.s32 %s237, %s20
          %p239 = scmp.lt.s32.totalorder %s238, 2
          %s240 = scalar_select %p239, %s238, 2
          %s241 = smul.u32 2, %s240
          %s242 = ssub.s32 5, %s241
          %p243 = scmp.lt.s32.totalorder %s242, 2
          %s244 = scalar_select %p243, %s242, 2
          %s245 = smul.u32 128, %s244
        $region28: #{tpu_custom_call.1} parent=15 // pred_fallthru
          _
      $region16: #{tpu_custom_call.1} parent=5 // pred_fallthru
        _
      %p246 = scmp.le.s32.totalorder 1, %s12
      %p247 = scmp.lt.s32.totalorder %s12, 5
      %p248 = pnand %p246, %p247
      %p249 = pneg %p248
      // Predicated region
      $region29: #{tpu_custom_call.1} parent=5 // pred_check
        _
      $region30: #{tpu_custom_call.1} parent=5 // pred_check_branch
        %251 = sbr.rel (%p248) target = $region32
      $region31: #{tpu_custom_call.1} parent=5 // pred_region
        %s252 = ssub.s32 %s12, 1
        %s253 = smul.u32 %s21, 2
        %s254 = sadd.s32 %s253, %s22
        %p255 = scmp.lt.s32.totalorder %s254, 2
        %s256 = scalar_select %p255, %s254, 2
        %s257 = smul.u32 2, %s256
        %s258 = ssub.s32 5, %s257
        %p259 = scmp.lt.s32.totalorder %s258, 2
        %s260 = scalar_select %p259, %s258, 2
        %s261 = smul.u32 128, %s260
        %p262 = scmp.lt.s32.totalorder %s257, 4
        %s263 = scalar_select %p262, %s257, 4
        %s264 = smul.addr %s263, 8
        %s265 = scalar_lea.vmem %s0, %s264
        %p266 = pneg %p58
        %p267 = pneg %p55
        %s268 = smul.u32 %s21, 2
        %s269 = sadd.s32 %s268, %s22
        %p270 = scmp.lt.s32.totalorder %s269, 2
        %s271 = scalar_select %p270, %s269, 2
        %s272 = smul.u32 2, %s271
        %s273 = ssub.s32 5, %s272
        %p274 = scmp.lt.s32.totalorder %s273, 2
        %s275 = scalar_select %p274, %s273, 2
        %s276 = smul.u32 128, %s275
        %p277 = scmp.lt.s32.totalorder %s272, 4
        %s278 = scalar_select %p277, %s272, 4
        %s279 = smul.addr %s278, 8
        %s280 = scalar_lea.vmem %s1, %s279
        %p281 = pneg %p92
        %p282 = pneg %p89
        %s283 = smul.u32 %s21, 2
        %s284 = sadd.s32 %s283, %s22
        %p285 = scmp.lt.s32.totalorder %s284, 2
        %s286 = scalar_select %p285, %s284, 2
        %s287 = smul.u32 2, %s286
        %s288 = ssub.s32 5, %s287
        %p289 = scmp.lt.s32.totalorder %s288, 2
        %s290 = scalar_select %p289, %s288, 2
        %s291 = smul.u32 128, %s290
        %p292 = scmp.lt.s32.totalorder %s287, 4
        %s293 = scalar_select %p292, %s287, 4
        %s294 = smul.addr %s293, 8
        %s295 = scalar_lea.vmem %s2, %s294
        %p296 = pneg %p126
        %p297 = pneg %p123
        %p298 = pneg %p152
        %p299 = pneg %p149
        %s300 = sand.u32 %s139, 1
        %s301 = scalar_lea.sflag [#allocation3], %s300
        %s302 = sand.u32 %s139, 1
        %s303 = smul.addr %s302, 8
        %s304 = scalar_lea.vmem [#allocation2], %s303
        %s305 = smul.u32 %s21, 2
        %s306 = sadd.s32 %s305, %s22
        %p307 = scmp.lt.s32.totalorder %s306, 2
        %s308 = scalar_select %p307, %s306, 2
        %s309 = smul.u32 2, %s308
        %s310 = ssub.s32 5, %s309
        %p311 = scmp.lt.s32.totalorder %s310, 2
        %s312 = scalar_select %p311, %s310, 2
        %s313 = smul.u32 128, %s312
        %p314 = scmp.lt.s32.totalorder %s309, 4
        %s315 = scalar_select %p314, %s309, 4
        %s316 = smul.addr %s315, 8
        %s317 = scalar_lea.vmem %s0, %s316
        %s318 = smul.u32 %s21, 2
        %s319 = sadd.s32 %s318, %s22
        %p320 = scmp.lt.s32.totalorder %s319, 2
        %s321 = scalar_select %p320, %s319, 2
        %s322 = smul.u32 2, %s321
        %s323 = ssub.s32 5, %s322
        %p324 = scmp.lt.s32.totalorder %s323, 2
        %s325 = scalar_select %p324, %s323, 2
        %s326 = smul.u32 128, %s325
        %s327 = smul.u32 %s21, 2
        %s328 = sadd.s32 %s327, %s22
        %p329 = scmp.lt.s32.totalorder %s328, 2
        %s330 = scalar_select %p329, %s328, 2
        %s331 = smul.u32 2, %s330
        %s332 = ssub.s32 5, %s331
        %p333 = scmp.lt.s32.totalorder %s332, 2
        %s334 = scalar_select %p333, %s332, 2
        %s335 = smul.u32 128, %s334
        %p336 = scmp.lt.s32.totalorder %s331, 4
        %s337 = scalar_select %p336, %s331, 4
        %s338 = smul.addr %s337, 8
        %s339 = scalar_lea.vmem %s1, %s338
        %s340 = smul.u32 %s21, 2
        %s341 = sadd.s32 %s340, %s22
        %p342 = scmp.lt.s32.totalorder %s341, 2
        %s343 = scalar_select %p342, %s341, 2
        %s344 = smul.u32 2, %s343
        %s345 = ssub.s32 5, %s344
        %p346 = scmp.lt.s32.totalorder %s345, 2
        %s347 = scalar_select %p346, %s345, 2
        %s348 = smul.u32 128, %s347
        %s349 = smul.u32 %s21, 2
        %s350 = sadd.s32 %s349, %s22
        %p351 = scmp.lt.s32.totalorder %s350, 2
        %s352 = scalar_select %p351, %s350, 2
        %s353 = smul.u32 2, %s352
        %s354 = ssub.s32 5, %s353
        %p355 = scmp.lt.s32.totalorder %s354, 2
        %s356 = scalar_select %p355, %s354, 2
        %s357 = smul.u32 128, %s356
        %p358 = scmp.lt.s32.totalorder %s353, 4
        %s359 = scalar_select %p358, %s353, 4
        %s360 = smul.addr %s359, 8
        %s361 = scalar_lea.vmem %s2, %s360
        %s362 = smul.u32 %s21, 2
        %s363 = sadd.s32 %s362, %s22
        %p364 = scmp.lt.s32.totalorder %s363, 2
        %s365 = scalar_select %p364, %s363, 2
        %s366 = smul.u32 2, %s365
        %s367 = ssub.s32 5, %s366
        %p368 = scmp.lt.s32.totalorder %s367, 2
        %s369 = scalar_select %p368, %s367, 2
        %s370 = smul.u32 128, %s369
        %p371 = scmp.eq.s32.totalorder %s22, 0
        // Predicated region
        $region33: #{tpu_custom_call.1} parent=31 // pred_check
          %p372 = pneg %p371
        $region34: #{tpu_custom_call.1} parent=31 // pred_check_branch
          %374 = sbr.rel (%p372) target = $region36
        $region35: #{tpu_custom_call.1} parent=31 // pred_region
          %375 = vst [vmem:[%s304] sm:$0xff] 0.0
        $region36: #{tpu_custom_call.1} parent=31 // pred_fallthru
          _
        %v376 = vld [vmem:[%s317] sm:$0xff]
        %v377 = vld [vmem:[%s317 + $0x8] sm:$0xff]
        %v378 = vld [vmem:[%s339] sm:$0xff]
        %v379 = vld [vmem:[%s339 + $0x8] sm:$0xff]
        %v380 = vld [vmem:[%s361] sm:$0xff]
        %v381 = vld [vmem:[%s361 + $0x8] sm:$0xff]
        %s382 = smul.u32 %s21, 2
        %s383 = sadd.s32 %s382, %s22
        %s384 = smul.u32 %s383, 16
        %v385 = vlaneseq
        %v386 = vshrl.u32 %v385, 7
        %v387 = vadd.s32 %v386, 8
        %v388 = vstv %s384
        %v389 = vadd.s32 %v388, %v386
        %v390 = vadd.s32 %v388, %v387
        %vm391 = vcmp.lt.s32.totalorder %v389, 40
        %vm392 = vcmp.lt.s32.totalorder %v390, 40
        %v393 = vlaneseq
        %v394 = vand.u32 %v393, 127
        %395 = vset.pattern.permute.xlu0 0
        %396 = vperm.xlu0 %395, %v378
        %v397 = vpop.permute.xlu0 %396
        %398 = vset.pattern.permute.xlu0 0
        %399 = vperm.xlu0 %398, %v379
        %v400 = vpop.permute.xlu0 %399
        %vm401 = vcmp.eq.s32.totalorder %v394, %v397
        %vm402 = vcmp.eq.s32.totalorder %v394, %v400
        %vm403 = vcmask 130048
        %v404 = vsel %vm403, %v376, -inf
        %405 = vmax.xlane.f32.xlu0 %v404
        %v406 = vpop.xlane.xlu0 %405
        %v407 = vsel %vm403, %v377, -inf
        %408 = vmax.xlane.f32.xlu0 %v407
        %v409 = vpop.xlane.xlu0 %408
        %v410 = vsub.f32 %v376, %v406
        %v411 = vsub.f32 %v377, %v409
        %v412 = vsel %vm401, %v410, 0.0
        %v413 = vsel %vm402, %v411, 0.0
        %v414 = vsel %vm403, %v412, 0.0
        %415 = vadd.xlane.f32.xlu0 %v414
        %v416 = vpop.xlane.xlu0 %415
        %v417 = vsel %vm403, %v413, 0.0
        %418 = vadd.xlane.f32.xlu0 %v417
        %v419 = vpop.xlane.xlu0 %418
        %v420 = vmul.f32 %v410, 1.442695
        %v421 = vpow.pop %v420
        %v422 = vmul.f32 %v411, 1.442695
        %v423 = vpow.pop %v422
        %v424 = vsel %vm403, %v421, 0.0
        %425 = vadd.xlane.f32.xlu0 %v424
        %v426 = vpop.xlane.xlu0 %425
        %v427 = vsel %vm403, %v423, 0.0
        %428 = vadd.xlane.f32.xlu0 %v427
        %v429 = vpop.xlane.xlu0 %428
        %v430 = vlog2.pop %v426
        %v431 = vmul.f32 %v430, 0.6931472
        %v432 = vlog2.pop %v429
        %v433 = vmul.f32 %v432, 0.6931472
        %v434 = vsub.f32 %v416, %v431
        %v435 = vsub.f32 %v419, %v433
        %v436 = vmul.f32 %v434, 1.442695
        %v437 = vpow.pop %v436
        %v438 = vmul.f32 %v435, 1.442695
        %v439 = vpow.pop %v438
        %v440 = vsub.f32 1.0, %v437
        %v441 = vsub.f32 1.0, %v439
        %v442 = vmax.f32 %v440, 0.0
        %v443 = vmax.f32 %v441, 0.0
        %v444 = vmul.f32 %v442, %v442
        %v445 = vmul.f32 %v443, %v443
        %v446 = vsub.f32 0.0, %v380
        %v447 = vsub.f32 0.0, %v381
        %v448 = vmul.f32 %v446, %v444
        %v449 = vmul.f32 %v447, %v445
        %v450 = vmul.f32 %v448, %v434
        %v451 = vmul.f32 %v449, %v435
        %v452 = vsel %vm391, %v450, 0.0
        %v453 = vsel %vm392, %v451, 0.0
        %v454 = vld [vmem:[%s304] sm:$0xff]
        %vm455 = vcmask 7168
        %v456 = vsel %vm455, %v452, 0.0
        %v457 = vsel %vm455, %v453, 0.0
        %v458 = vadd.f32 %v456, %v457
        %459 = vadd.xlane.f32.xlu0 %v458
        %v460 = vpop.xlane.xlu0 %459
        %v461 = vrot.slane %v460, 4
        %v462 = vadd.f32 %v460, %v461
        %v463 = vrot.slane %v462, 2
        %v464 = vadd.f32 %v462, %v463
        %v465 = vrot.slane %v464, 1
        %v466 = vadd.f32 %v464, %v465
        %s467 = vtos %v466
        %v468 = vstv %s467
        %v469 = vadd.f32 %v454, %v468
        %470 = vst [vmem:[%s304] sm:$0xff] %v469
        %s471 = sand.u32 %s139, 1
        %s472 = scalar_lea.sflag [#allocation3], %s471
        %s473 = sand.u32 %s139, 1
        %s474 = smul.addr %s473, 8
        %s475 = scalar_lea.vmem [#allocation2], %s474
        // Predicated region
        $region37: #{tpu_custom_call.1} parent=31 // pred_check
          %p476 = pneg %p149
        $region38: #{tpu_custom_call.1} parent=31 // pred_check_branch
          %478 = sbr.rel (%p476) target = $region40
        $region39: #{tpu_custom_call.1} parent=31 // pred_region
          %s480 = ssub.s32 128, 128
          %481 = vsyncadd %s472, %s480
          %s482 = smul.addr %s21, 128
          %s483 = scalar_lea.hbm %s3, %s482
          %s485 = sshll.u32 %s475, 4
          %s486 = int_to_ptr.vmem [resolvable:$true] %s485
          %488 = dma.vmem_to_hbm [thread:$0]  %s486, 128, %s483, %s472
        $region40: #{tpu_custom_call.1} parent=31 // pred_fallthru
          _
      $region32: #{tpu_custom_call.1} parent=5 // pred_fallthru
        _
      %p489 = scmp.le.s32.totalorder 2, %s12
      // Predicated region
      $region41: #{tpu_custom_call.1} parent=5 // pred_check
        %p490 = pneg %p489
      $region42: #{tpu_custom_call.1} parent=5 // pred_check_branch
        %492 = sbr.rel (%p490) target = $region44
      $region43: #{tpu_custom_call.1} parent=5 // pred_region
        %s493 = ssub.s32 %s12, 2
        // Predicated region
        $region45: #{tpu_custom_call.1} parent=43 // pred_check
          %p494 = pneg %p155
        $region46: #{tpu_custom_call.1} parent=43 // pred_check_branch
          %496 = sbr.rel (%p494) target = $region48
        $region47: #{tpu_custom_call.1} parent=43 // pred_region
          %s497 = sand.u32 %s140, 1
          %s498 = scalar_lea.sflag [#allocation3], %s497
          %s499 = sand.u32 %s140, 1
          %s500 = smul.addr %s499, 8
          %s501 = scalar_lea.vmem [#allocation2], %s500
          %502 = dma.done %s498, 128
        $region48: #{tpu_custom_call.1} parent=43 // pred_fallthru
          _
      $region44: #{tpu_custom_call.1} parent=5 // pred_fallthru
        _
    $region6: #{tpu_custom_call.1} parent=1 // loop_footer
      %s16 = sadd.s32 1, %s12
    $region7: #{tpu_custom_call.1} parent=1 // loop_footer_branch
      %11 = sbr.rel target = $region3
    $region8: #{tpu_custom_call.1} parent=1 // loop_exit
      _
    %503 = vsyncpa [#allocation3], 1
    %s504 = scalar_lea.sflag [#allocation3], 1
    %505 = vsyncpa %s504, 1

</llo_original>
